<compile_context>
chip_gen: v5e
topology: v5e:2x2
jax: 0.10.0
libtpu: 0.0.40
codegen_flags: <defaults>
</compile_context>

<pallas_src>
import functools

import jax
import jax.numpy as jnp
from jax import lax
from jax.experimental import pallas as pl
from jax.experimental.pallas import tpu as pltpu

_BN_EPS = 1e-5


def _round_up(v, m):
    return ((v + m - 1) // m) * m


def _fused_mlp_kernel(*refs, activation, n_real, matmul_dtype):
    """Whole MLPEncodingBlock forward in one kernel.

    refs layout: (x_ref, [wt, b, gamma, beta] * L, o_ref).
    All feature dims are zero-padded to multiples of 128; padded weight
    rows/cols and padded gamma/beta are zero, so padded lanes stay zero.
    """
    x_ref = refs[0]
    o_ref = refs[-1]
    param_refs = refs[1:-1]
    n_layers = len(param_refs) // 4
    n_pad = x_ref.shape[0]

    # Row-validity mask for batch padding (hoisted out of the layer loop).
    if n_real != n_pad:
        row_ids = lax.broadcasted_iota(jnp.int32, (n_pad, 1), 0)
        row_mask = row_ids < n_real
    else:
        row_mask = None
    inv_n = jnp.float32(1.0 / n_real)

    h = x_ref[...]                                            # (N_pad, Din_pad)
    for l in range(n_layers):
        wt = param_refs[4 * l][...]                           # (Din_pad, Dout_pad)
        b = param_refs[4 * l + 1][...]                        # (1, Dout_pad)
        g = param_refs[4 * l + 2][...]
        be = param_refs[4 * l + 3][...]

        # ---- Linear ------------------------------------------------------
        if matmul_dtype is not None:
            y = jnp.dot(h.astype(matmul_dtype), wt.astype(matmul_dtype),
                        preferred_element_type=jnp.float32)
        else:
            y = jnp.dot(h, wt, preferred_element_type=jnp.float32)
        y = y + b

        # ---- Activation ----------------------------------------------------
        if activation == "ReLU":
            a = jnp.maximum(y, 0.0)
        elif activation == "Tanh":
            a = jnp.tanh(y)
        elif activation == "Sigmoid":
            a = jax.nn.sigmoid(y)
        else:
            raise ValueError(f"unsupported activation: {activation}")

        # ---- BatchNorm1d (training mode, biased batch statistics) ---------
        a_stat = jnp.where(row_mask, a, 0.0) if row_mask is not None else a
        mean = jnp.sum(a_stat, axis=0, keepdims=True) * inv_n
        c = a - mean                                          # reused below
        c_stat = jnp.where(row_mask, c, 0.0) if row_mask is not None else c
        var = jnp.sum(c_stat * c_stat, axis=0, keepdims=True) * inv_n
        inv = lax.rsqrt(var + _BN_EPS)
        h = c * inv * g + be
        # TODO(synk): dropout>0 (training-mode random mask) not implemented;
        # with dropout=0 the PyTorch module adds no Dropout layer.

    o_ref[...] = h.astype(o_ref.dtype)


def init_mlp_params(key, input_size, layers, output_size):
    """Deterministic parameter init mimicking nn.Linear defaults + BN affine."""
    dims = [input_size] + list(layers) + [output_size]
    params = []
    for i in range(1, len(dims)):
        d_in, d_out = dims[i - 1], dims[i]
        key, k1, k2, k3, k4 = jax.random.split(key, 5)
        bound = 1.0 / (d_in ** 0.5)
        w = jax.random.uniform(k1, (d_out, d_in), jnp.float32, -bound, bound)
        b = jax.random.uniform(k2, (d_out,), jnp.float32, -bound, bound)
        gamma = 1.0 + 0.1 * jax.random.normal(k3, (d_out,), jnp.float32)
        beta = 0.1 * jax.random.normal(k4, (d_out,), jnp.float32)
        params.append((w, b, gamma, beta))
    return params


def prepare_params(params, input_size):
    """One-time prep: transpose W to (Din,Dout), pad everything lane-dense.

    Zero-padding of weights/gamma/beta guarantees padded feature lanes stay
    exactly zero through every layer.
    """
    prepared, dims = [], []
    d_in = input_size
    for (w, b, gamma, beta) in params:
        d_out = w.shape[0]
        din_p = _round_up(d_in, 128)
        dout_p = _round_up(d_out, 128)
        wt = jnp.zeros((din_p, dout_p), jnp.float32).at[:d_in, :d_out].set(w.T)
        b_p = jnp.zeros((1, dout_p), jnp.float32).at[:, :d_out].set(b)
        g_p = jnp.zeros((1, dout_p), jnp.float32).at[:, :d_out].set(gamma)
        be_p = jnp.zeros((1, dout_p), jnp.float32).at[:, :d_out].set(beta)
        prepared.append((wt, b_p, g_p, be_p))
        dims.append((d_in, d_out, din_p, dout_p))
        d_in = d_out
    return prepared, dims


def mlp_encoding_block(x, prepared_params, dims, *, activation="ReLU",
                       matmul_dtype=None):
    """MLPEncodingBlock.forward as one fused pallas_call."""
    n, d_in = x.shape
    n_pad = _round_up(n, 8)
    din0_p = dims[0][2]
    d_out, dout_p = dims[-1][1], dims[-1][3]

    x_p = jnp.zeros((n_pad, din0_p), jnp.float32).at[:n, :d_in].set(x)
    flat_params = [p for layer in prepared_params for p in layer]

    in_specs = [pl.BlockSpec((n_pad, din0_p), lambda i: (0, 0))]
    for (_, _, dip, dop) in dims:
        in_specs += [
            pl.BlockSpec((dip, dop), lambda i: (0, 0)),
            pl.BlockSpec((1, dop), lambda i: (0, 0)),
            pl.BlockSpec((1, dop), lambda i: (0, 0)),
            pl.BlockSpec((1, dop), lambda i: (0, 0)),
        ]

    kernel = functools.partial(_fused_mlp_kernel, activation=activation,
                               n_real=n, matmul_dtype=matmul_dtype)

    out_p = pl.pallas_call(
        kernel,
        out_shape=jax.ShapeDtypeStruct((n_pad, dout_p), jnp.float32),
        grid=(1,),
        in_specs=in_specs,
        out_specs=pl.BlockSpec((n_pad, dout_p), lambda i: (0, 0)),
        compiler_params=pltpu.CompilerParams(
            dimension_semantics=("arbitrary",),
            vmem_limit_bytes=64 * 1024 * 1024,
        ),
    )(x_p, *flat_params)
    return out_p[:n, :d_out]


def _reference(x, params, activation="ReLU"):
    """Pure-jnp reference of the same forward pass (for correctness check)."""
    for w, b, g, be in params:
        y = x @ w.T + b
        if activation == "ReLU":
            a = jnp.maximum(y, 0.0)
        elif activation == "Tanh":
            a = jnp.tanh(y)
        else:
            a = jax.nn.sigmoid(y)
        mean = a.mean(0, keepdims=True)
        var = ((a - mean) ** 2).mean(0, keepdims=True)
        x = (a - mean) / jnp.sqrt(var + _BN_EPS) * g + be
    return x


if __name__ == "__main__":
    # MLPEncodingBlock(input_size=8, output_size=4, layers=[32, 16],
    #                  activation='ReLU', dropout=0.0) on a batch of 16 samples.
    key = jax.random.PRNGKey(0)
    k_x, k_p = jax.random.split(key)

    N, INPUT_SIZE, LAYERS, OUTPUT_SIZE = 16, 8, [32, 16], 4
    x = jax.random.normal(k_x, (N, INPUT_SIZE), jnp.float32)
    params = init_mlp_params(k_p, INPUT_SIZE, LAYERS, OUTPUT_SIZE)
    prepared, dims = prepare_params(params, INPUT_SIZE)   # one-time prep

    # f32 MXU path: exact-tolerance check against the reference.
    out = jax.block_until_ready(
        mlp_encoding_block(x, prepared, dims, activation="ReLU"))
    ref = _reference(x, params, "ReLU")
    assert out.shape == (N, OUTPUT_SIZE), out.shape
    assert jnp.allclose(out, ref, rtol=1e-5, atol=1e-5), \
        float(jnp.abs(out - ref).max())

    # Batch not a multiple of 8: exercises the row-masked BatchNorm statistics.
    x2 = x[:13]
    out2 = jax.block_until_ready(
        mlp_encoding_block(x2, prepared, dims, activation="ReLU"))
    ref2 = _reference(x2, params, "ReLU")
    assert jnp.allclose(out2, ref2, rtol=1e-5, atol=1e-5), \
        float(jnp.abs(out2 - ref2).max())

    # bf16 MXU path (BN statistics stay f32): relaxed tolerance.
    out_bf16 = jax.block_until_ready(
        mlp_encoding_block(x, prepared, dims, activation="ReLU",
                           matmul_dtype=jnp.bfloat16))
    assert jnp.allclose(out_bf16, ref, rtol=1e-1, atol=1.5e-1), \
        float(jnp.abs(out_bf16 - ref).max())

    print("KERNEL_OK")
</pallas_src>

<mosaic_0001>
module attributes {stable_mosaic.version = 11 : i64} {
  func.func @_fused_mlp_kernel(%arg0: i32, %arg1: memref<16x128xf32, #tpu.memory_space<vmem>>, %arg2: memref<128x128xf32, #tpu.memory_space<vmem>>, %arg3: memref<1x128xf32, #tpu.memory_space<vmem>>, %arg4: memref<1x128xf32, #tpu.memory_space<vmem>>, %arg5: memref<1x128xf32, #tpu.memory_space<vmem>>, %arg6: memref<128x128xf32, #tpu.memory_space<vmem>>, %arg7: memref<1x128xf32, #tpu.memory_space<vmem>>, %arg8: memref<1x128xf32, #tpu.memory_space<vmem>>, %arg9: memref<1x128xf32, #tpu.memory_space<vmem>>, %arg10: memref<128x128xf32, #tpu.memory_space<vmem>>, %arg11: memref<1x128xf32, #tpu.memory_space<vmem>>, %arg12: memref<1x128xf32, #tpu.memory_space<vmem>>, %arg13: memref<1x128xf32, #tpu.memory_space<vmem>>, %arg14: memref<16x128xf32, #tpu.memory_space<vmem>>) attributes {dimension_semantics = [#tpu.dimension_semantics<arbitrary>], iteration_bounds = array<i64: 1>, scalar_prefetch = 0 : i64, scratch_operands = 0 : i64, tpu.core_type = #tpu.core_type<tc>, window_params = [{pipeline_mode = #tpu.pipeline_mode<synchronous>, transform_indices = @transform_0, window_bounds = array<i64: 16, 128>}, {pipeline_mode = #tpu.pipeline_mode<synchronous>, transform_indices = @transform_1, window_bounds = array<i64: 128, 128>}, {pipeline_mode = #tpu.pipeline_mode<synchronous>, transform_indices = @transform_2, window_bounds = array<i64: 1, 128>}, {pipeline_mode = #tpu.pipeline_mode<synchronous>, transform_indices = @transform_3, window_bounds = array<i64: 1, 128>}, {pipeline_mode = #tpu.pipeline_mode<synchronous>, transform_indices = @transform_4, window_bounds = array<i64: 1, 128>}, {pipeline_mode = #tpu.pipeline_mode<synchronous>, transform_indices = @transform_5, window_bounds = array<i64: 128, 128>}, {pipeline_mode = #tpu.pipeline_mode<synchronous>, transform_indices = @transform_6, window_bounds = array<i64: 1, 128>}, {pipeline_mode = #tpu.pipeline_mode<synchronous>, transform_indices = @transform_7, window_bounds = array<i64: 1, 128>}, {pipeline_mode = #tpu.pipeline_mode<synchronous>, transform_indices = @transform_8, window_bounds = array<i64: 1, 128>}, {pipeline_mode = #tpu.pipeline_mode<synchronous>, transform_indices = @transform_9, window_bounds = array<i64: 128, 128>}, {pipeline_mode = #tpu.pipeline_mode<synchronous>, transform_indices = @transform_10, window_bounds = array<i64: 1, 128>}, {pipeline_mode = #tpu.pipeline_mode<synchronous>, transform_indices = @transform_11, window_bounds = array<i64: 1, 128>}, {pipeline_mode = #tpu.pipeline_mode<synchronous>, transform_indices = @transform_12, window_bounds = array<i64: 1, 128>}, {pipeline_mode = #tpu.pipeline_mode<synchronous>, transform_indices = @transform_13, window_bounds = array<i64: 16, 128>}]} {
    %c0 = arith.constant 0 : index
    %c0_0 = arith.constant 0 : index
    %0 = vector.load %arg1[%c0, %c0_0] : memref<16x128xf32, #tpu.memory_space<vmem>>, vector<16x128xf32>
    %c0_1 = arith.constant 0 : index
    %c0_2 = arith.constant 0 : index
    %1 = vector.load %arg2[%c0_1, %c0_2] : memref<128x128xf32, #tpu.memory_space<vmem>>, vector<128x128xf32>
    %c0_3 = arith.constant 0 : index
    %c0_4 = arith.constant 0 : index
    %2 = vector.load %arg3[%c0_3, %c0_4] : memref<1x128xf32, #tpu.memory_space<vmem>>, vector<1x128xf32>
    %c0_5 = arith.constant 0 : index
    %c0_6 = arith.constant 0 : index
    %3 = vector.load %arg4[%c0_5, %c0_6] : memref<1x128xf32, #tpu.memory_space<vmem>>, vector<1x128xf32>
    %c0_7 = arith.constant 0 : index
    %c0_8 = arith.constant 0 : index
    %4 = vector.load %arg5[%c0_7, %c0_8] : memref<1x128xf32, #tpu.memory_space<vmem>>, vector<1x128xf32>
    %cst = arith.constant dense<0.000000e+00> : vector<16x128xf32>
    %5 = tpu.matmul %0, %1, %cst {dimension_numbers = #tpu.dot_dimension_numbers<[1], [0], [0], [1], [0, 0, 1, 1], [], []>} : vector<16x128xf32>, vector<128x128xf32>, vector<16x128xf32> -> vector<16x128xf32>
    %6 = vector.broadcast %2 : vector<1x128xf32> to vector<16x128xf32>
    %7 = arith.addf %5, %6 : vector<16x128xf32>
    %cst_9 = arith.constant 0.000000e+00 : f32
    %8 = vector.broadcast %cst_9 : f32 to vector<16x128xf32>
    %9 = arith.maximumf %7, %8 : vector<16x128xf32>
    %cst_10 = arith.constant dense<0.000000e+00> : vector<128xf32>
    %10 = vector.multi_reduction <add>, %9, %cst_10 [0] : vector<16x128xf32> to vector<128xf32>
    %11 = vector.shape_cast %10 : vector<128xf32> to vector<1x128xf32>
    %cst_11 = arith.constant 6.250000e-02 : f32
    %12 = vector.broadcast %cst_11 : f32 to vector<1x128xf32>
    %13 = arith.mulf %11, %12 : vector<1x128xf32>
    %14 = vector.broadcast %13 : vector<1x128xf32> to vector<16x128xf32>
    %15 = arith.subf %9, %14 : vector<16x128xf32>
    %16 = arith.mulf %15, %15 : vector<16x128xf32>
    %cst_12 = arith.constant dense<0.000000e+00> : vector<128xf32>
    %17 = vector.multi_reduction <add>, %16, %cst_12 [0] : vector<16x128xf32> to vector<128xf32>
    %18 = vector.shape_cast %17 : vector<128xf32> to vector<1x128xf32>
    %cst_13 = arith.constant 6.250000e-02 : f32
    %19 = vector.broadcast %cst_13 : f32 to vector<1x128xf32>
    %20 = arith.mulf %18, %19 : vector<1x128xf32>
    %cst_14 = arith.constant 9.99999974E-6 : f32
    %21 = vector.broadcast %cst_14 : f32 to vector<1x128xf32>
    %22 = arith.addf %20, %21 : vector<1x128xf32>
    %23 = math.rsqrt %22 : vector<1x128xf32>
    %24 = vector.broadcast %23 : vector<1x128xf32> to vector<16x128xf32>
    %25 = arith.mulf %15, %24 : vector<16x128xf32>
    %26 = vector.broadcast %3 : vector<1x128xf32> to vector<16x128xf32>
    %27 = arith.mulf %25, %26 : vector<16x128xf32>
    %28 = vector.broadcast %4 : vector<1x128xf32> to vector<16x128xf32>
    %29 = arith.addf %27, %28 : vector<16x128xf32>
    %c0_15 = arith.constant 0 : index
    %c0_16 = arith.constant 0 : index
    %30 = vector.load %arg6[%c0_15, %c0_16] : memref<128x128xf32, #tpu.memory_space<vmem>>, vector<128x128xf32>
    %c0_17 = arith.constant 0 : index
    %c0_18 = arith.constant 0 : index
    %31 = vector.load %arg7[%c0_17, %c0_18] : memref<1x128xf32, #tpu.memory_space<vmem>>, vector<1x128xf32>
    %c0_19 = arith.constant 0 : index
    %c0_20 = arith.constant 0 : index
    %32 = vector.load %arg8[%c0_19, %c0_20] : memref<1x128xf32, #tpu.memory_space<vmem>>, vector<1x128xf32>
    %c0_21 = arith.constant 0 : index
    %c0_22 = arith.constant 0 : index
    %33 = vector.load %arg9[%c0_21, %c0_22] : memref<1x128xf32, #tpu.memory_space<vmem>>, vector<1x128xf32>
    %cst_23 = arith.constant dense<0.000000e+00> : vector<16x128xf32>
    %34 = tpu.matmul %29, %30, %cst_23 {dimension_numbers = #tpu.dot_dimension_numbers<[1], [0], [0], [1], [0, 0, 1, 1], [], []>} : vector<16x128xf32>, vector<128x128xf32>, vector<16x128xf32> -> vector<16x128xf32>
    %35 = vector.broadcast %31 : vector<1x128xf32> to vector<16x128xf32>
    %36 = arith.addf %34, %35 : vector<16x128xf32>
    %cst_24 = arith.constant 0.000000e+00 : f32
    %37 = vector.broadcast %cst_24 : f32 to vector<16x128xf32>
    %38 = arith.maximumf %36, %37 : vector<16x128xf32>
    %cst_25 = arith.constant dense<0.000000e+00> : vector<128xf32>
    %39 = vector.multi_reduction <add>, %38, %cst_25 [0] : vector<16x128xf32> to vector<128xf32>
    %40 = vector.shape_cast %39 : vector<128xf32> to vector<1x128xf32>
    %cst_26 = arith.constant 6.250000e-02 : f32
    %41 = vector.broadcast %cst_26 : f32 to vector<1x128xf32>
    %42 = arith.mulf %40, %41 : vector<1x128xf32>
    %43 = vector.broadcast %42 : vector<1x128xf32> to vector<16x128xf32>
    %44 = arith.subf %38, %43 : vector<16x128xf32>
    %45 = arith.mulf %44, %44 : vector<16x128xf32>
    %cst_27 = arith.constant dense<0.000000e+00> : vector<128xf32>
    %46 = vector.multi_reduction <add>, %45, %cst_27 [0] : vector<16x128xf32> to vector<128xf32>
    %47 = vector.shape_cast %46 : vector<128xf32> to vector<1x128xf32>
    %cst_28 = arith.constant 6.250000e-02 : f32
    %48 = vector.broadcast %cst_28 : f32 to vector<1x128xf32>
    %49 = arith.mulf %47, %48 : vector<1x128xf32>
    %cst_29 = arith.constant 9.99999974E-6 : f32
    %50 = vector.broadcast %cst_29 : f32 to vector<1x128xf32>
    %51 = arith.addf %49, %50 : vector<1x128xf32>
    %52 = math.rsqrt %51 : vector<1x128xf32>
    %53 = vector.broadcast %52 : vector<1x128xf32> to vector<16x128xf32>
    %54 = arith.mulf %44, %53 : vector<16x128xf32>
    %55 = vector.broadcast %32 : vector<1x128xf32> to vector<16x128xf32>
    %56 = arith.mulf %54, %55 : vector<16x128xf32>
    %57 = vector.broadcast %33 : vector<1x128xf32> to vector<16x128xf32>
    %58 = arith.addf %56, %57 : vector<16x128xf32>
    %c0_30 = arith.constant 0 : index
    %c0_31 = arith.constant 0 : index
    %59 = vector.load %arg10[%c0_30, %c0_31] : memref<128x128xf32, #tpu.memory_space<vmem>>, vector<128x128xf32>
    %c0_32 = arith.constant 0 : index
    %c0_33 = arith.constant 0 : index
    %60 = vector.load %arg11[%c0_32, %c0_33] : memref<1x128xf32, #tpu.memory_space<vmem>>, vector<1x128xf32>
    %c0_34 = arith.constant 0 : index
    %c0_35 = arith.constant 0 : index
    %61 = vector.load %arg12[%c0_34, %c0_35] : memref<1x128xf32, #tpu.memory_space<vmem>>, vector<1x128xf32>
    %c0_36 = arith.constant 0 : index
    %c0_37 = arith.constant 0 : index
    %62 = vector.load %arg13[%c0_36, %c0_37] : memref<1x128xf32, #tpu.memory_space<vmem>>, vector<1x128xf32>
    %cst_38 = arith.constant dense<0.000000e+00> : vector<16x128xf32>
    %63 = tpu.matmul %58, %59, %cst_38 {dimension_numbers = #tpu.dot_dimension_numbers<[1], [0], [0], [1], [0, 0, 1, 1], [], []>} : vector<16x128xf32>, vector<128x128xf32>, vector<16x128xf32> -> vector<16x128xf32>
    %64 = vector.broadcast %60 : vector<1x128xf32> to vector<16x128xf32>
    %65 = arith.addf %63, %64 : vector<16x128xf32>
    %cst_39 = arith.constant 0.000000e+00 : f32
    %66 = vector.broadcast %cst_39 : f32 to vector<16x128xf32>
    %67 = arith.maximumf %65, %66 : vector<16x128xf32>
    %cst_40 = arith.constant dense<0.000000e+00> : vector<128xf32>
    %68 = vector.multi_reduction <add>, %67, %cst_40 [0] : vector<16x128xf32> to vector<128xf32>
    %69 = vector.shape_cast %68 : vector<128xf32> to vector<1x128xf32>
    %cst_41 = arith.constant 6.250000e-02 : f32
    %70 = vector.broadcast %cst_41 : f32 to vector<1x128xf32>
    %71 = arith.mulf %69, %70 : vector<1x128xf32>
    %72 = vector.broadcast %71 : vector<1x128xf32> to vector<16x128xf32>
    %73 = arith.subf %67, %72 : vector<16x128xf32>
    %74 = arith.mulf %73, %73 : vector<16x128xf32>
    %cst_42 = arith.constant dense<0.000000e+00> : vector<128xf32>
    %75 = vector.multi_reduction <add>, %74, %cst_42 [0] : vector<16x128xf32> to vector<128xf32>
    %76 = vector.shape_cast %75 : vector<128xf32> to vector<1x128xf32>
    %cst_43 = arith.constant 6.250000e-02 : f32
    %77 = vector.broadcast %cst_43 : f32 to vector<1x128xf32>
    %78 = arith.mulf %76, %77 : vector<1x128xf32>
    %cst_44 = arith.constant 9.99999974E-6 : f32
    %79 = vector.broadcast %cst_44 : f32 to vector<1x128xf32>
    %80 = arith.addf %78, %79 : vector<1x128xf32>
    %81 = math.rsqrt %80 : vector<1x128xf32>
    %82 = vector.broadcast %81 : vector<1x128xf32> to vector<16x128xf32>
    %83 = arith.mulf %73, %82 : vector<16x128xf32>
    %84 = vector.broadcast %61 : vector<1x128xf32> to vector<16x128xf32>
    %85 = arith.mulf %83, %84 : vector<16x128xf32>
    %86 = vector.broadcast %62 : vector<1x128xf32> to vector<16x128xf32>
    %87 = arith.addf %85, %86 : vector<16x128xf32>
    %c0_45 = arith.constant 0 : index
    %c0_46 = arith.constant 0 : index
    %88 = vector.load %arg14[%c0_45, %c0_46] : memref<16x128xf32, #tpu.memory_space<vmem>>, vector<16x128xf32>
    tpu.vector_store %arg14[%c0_45, %c0_46], %87 {strides = array<i32>} : memref<16x128xf32, #tpu.memory_space<vmem>>, vector<16x128xf32>,
    return
  }
  func.func @transform_0(%arg0: i32) -> (i32, i32) {
    %c0_i32 = arith.constant 0 : i32
    %c0_i32_0 = arith.constant 0 : i32
    %c0_i32_1 = arith.constant 0 : i32
    return %c0_i32, %c0_i32_0 : i32, i32
  }
  func.func @transform_1(%arg0: i32) -> (i32, i32) {
    %c0_i32 = arith.constant 0 : i32
    %c0_i32_0 = arith.constant 0 : i32
    %c0_i32_1 = arith.constant 0 : i32
    return %c0_i32, %c0_i32_0 : i32, i32
  }
  func.func @transform_2(%arg0: i32) -> (i32, i32) {
    %c0_i32 = arith.constant 0 : i32
    %c0_i32_0 = arith.constant 0 : i32
    %c0_i32_1 = arith.constant 0 : i32
    return %c0_i32, %c0_i32_0 : i32, i32
  }
  func.func @transform_3(%arg0: i32) -> (i32, i32) {
    %c0_i32 = arith.constant 0 : i32
    %c0_i32_0 = arith.constant 0 : i32
    %c0_i32_1 = arith.constant 0 : i32
    return %c0_i32, %c0_i32_0 : i32, i32
  }
  func.func @transform_4(%arg0: i32) -> (i32, i32) {
    %c0_i32 = arith.constant 0 : i32
    %c0_i32_0 = arith.constant 0 : i32
    %c0_i32_1 = arith.constant 0 : i32
    return %c0_i32, %c0_i32_0 : i32, i32
  }
  func.func @transform_5(%arg0: i32) -> (i32, i32) {
    %c0_i32 = arith.constant 0 : i32
    %c0_i32_0 = arith.constant 0 : i32
    %c0_i32_1 = arith.constant 0 : i32
    return %c0_i32, %c0_i32_0 : i32, i32
  }
  func.func @transform_6(%arg0: i32) -> (i32, i32) {
    %c0_i32 = arith.constant 0 : i32
    %c0_i32_0 = arith.constant 0 : i32
    %c0_i32_1 = arith.constant 0 : i32
    return %c0_i32, %c0_i32_0 : i32, i32
  }
  func.func @transform_7(%arg0: i32) -> (i32, i32) {
    %c0_i32 = arith.constant 0 : i32
    %c0_i32_0 = arith.constant 0 : i32
    %c0_i32_1 = arith.constant 0 : i32
    return %c0_i32, %c0_i32_0 : i32, i32
  }
  func.func @transform_8(%arg0: i32) -> (i32, i32) {
    %c0_i32 = arith.constant 0 : i32
    %c0_i32_0 = arith.constant 0 : i32
    %c0_i32_1 = arith.constant 0 : i32
    return %c0_i32, %c0_i32_0 : i32, i32
  }
  func.func @transform_9(%arg0: i32) -> (i32, i32) {
    %c0_i32 = arith.constant 0 : i32
    %c0_i32_0 = arith.constant 0 : i32
    %c0_i32_1 = arith.constant 0 : i32
    return %c0_i32, %c0_i32_0 : i32, i32
  }
  func.func @transform_10(%arg0: i32) -> (i32, i32) {
    %c0_i32 = arith.constant 0 : i32
    %c0_i32_0 = arith.constant 0 : i32
    %c0_i32_1 = arith.constant 0 : i32
    return %c0_i32, %c0_i32_0 : i32, i32
  }
  func.func @transform_11(%arg0: i32) -> (i32, i32) {
    %c0_i32 = arith.constant 0 : i32
    %c0_i32_0 = arith.constant 0 : i32
    %c0_i32_1 = arith.constant 0 : i32
    return %c0_i32, %c0_i32_0 : i32, i32
  }
  func.func @transform_12(%arg0: i32) -> (i32, i32) {
    %c0_i32 = arith.constant 0 : i32
    %c0_i32_0 = arith.constant 0 : i32
    %c0_i32_1 = arith.constant 0 : i32
    return %c0_i32, %c0_i32_0 : i32, i32
  }
  func.func @transform_13(%arg0: i32) -> (i32, i32) {
    %c0_i32 = arith.constant 0 : i32
    %c0_i32_0 = arith.constant 0 : i32
    %c0_i32_1 = arith.constant 0 : i32
    return %c0_i32, %c0_i32_0 : i32, i32
  }
}

</mosaic_0001>

<llo_original>
// kernel: tpu_custom_call.1
$region0: #{tpu_custom_call.1}
  #allocation0 [shape = 'u32[]', space=smem, size = 0x4, offset = 0x4, fixed_abs, tag = 'smem constant byte address 0x4 - core index']
  #allocation1 [shape = 'u32[72,128]{1,0:T(1,128)}', space=vmem, size = 0x9000, scoped, tag = 'internal scratch']
  %s0 = inlined_call_operand.hbm [shape: f32[16,128], index: 0, kind: input, shape index: {}]
  %s1 = inlined_call_operand.hbm [shape: f32[128,128], index: 1, kind: input, shape index: {}]
  %s2 = inlined_call_operand.vmem [shape: f32[1,128], index: 2, kind: input, shape index: {}]
  %s3 = inlined_call_operand.vmem [shape: f32[1,128], index: 3, kind: input, shape index: {}]
  %s4 = inlined_call_operand.vmem [shape: f32[1,128], index: 4, kind: input, shape index: {}]
  %s5 = inlined_call_operand.hbm [shape: f32[128,128], index: 5, kind: input, shape index: {}]
  %s6 = inlined_call_operand.vmem [shape: f32[1,128], index: 6, kind: input, shape index: {}]
  %s7 = inlined_call_operand.vmem [shape: f32[1,128], index: 7, kind: input, shape index: {}]
  %s8 = inlined_call_operand.vmem [shape: f32[1,128], index: 8, kind: input, shape index: {}]
  %s9 = inlined_call_operand.hbm [shape: f32[128,128], index: 9, kind: input, shape index: {}]
  %s10 = inlined_call_operand.vmem [shape: f32[1,128], index: 10, kind: input, shape index: {}]
  %s11 = inlined_call_operand.vmem [shape: f32[1,128], index: 11, kind: input, shape index: {}]
  %s12 = inlined_call_operand.vmem [shape: f32[1,128], index: 12, kind: input, shape index: {}]
  %s13 = inlined_call_operand.hbm [shape: f32[16,128], index: 13, kind: output, shape index: {}]
  %s14 = sld [smem:[#allocation0]]
  $region78: #{tpu_custom_call.1} parent=0
    _
  %s16 = ssub.s32 1, %s14
  %s17 = scalar_select 0, %s16, %s14
  $region1: #{tpu_custom_call.1} parent=0
    #allocation2 [shape = 'u8[8192]{0}', space=vmem, size = 0x2000, scoped, tag = 'input window, operand 0, single buffered']
    #allocation3 [shape = 's32[1]{0}', space=sflag, size = 0x4, scoped, tag = 'scoped memory for tpu_custom_call.1']
    #allocation4 [shape = 's32[1]{0}', space=sflag, size = 0x4, scoped, tag = 'scoped memory for tpu_custom_call.1']
    #allocation5 [shape = 'u8[65536]{0}', space=vmem, size = 0x10000, scoped, tag = 'input window, operand 1, single buffered']
    #allocation6 [shape = 's32[1]{0}', space=sflag, size = 0x4, scoped, tag = 'scoped memory for tpu_custom_call.1']
    #allocation7 [shape = 'u8[65536]{0}', space=vmem, size = 0x10000, scoped, tag = 'input window, operand 5, single buffered']
    #allocation8 [shape = 'u8[65536]{0}', space=vmem, size = 0x10000, scoped, tag = 'input window, operand 9, single buffered']
    #allocation9 [shape = 's32[1]{0}', space=sflag, size = 0x4, scoped, tag = 'scoped memory for tpu_custom_call.1']
    #allocation10 [shape = 'u8[8192]{0}', space=vmem, size = 0x2000, scoped, tag = 'output window, operand 0, single buffered']
    %18 = vsyncpa [#allocation3], 0
    %19 = vsyncpa [#allocation6], 0
    %20 = vsyncpa [#allocation9], 0
    %21 = vsyncpa [#allocation4], 0
    // Predicated region
    $region2: #{tpu_custom_call.1} parent=1 // pred_check
      _
    $region3: #{tpu_custom_call.1} parent=1 // pred_check_branch
      %23 = sbr.rel (0) target = $region5
    $region4: #{tpu_custom_call.1} parent=1 // pred_region
      %25 = vsyncadd [#allocation3], 0
      %s26 = sshll.u32 %s0, 4
      %s27 = int_to_ptr.hbm [resolvable:$true] %s26
      %s28 = sshll.u32 [#allocation2], 4
      %s29 = int_to_ptr.vmem [resolvable:$true] %s28
      %34 = dma.hbm_to_vmem [thread:$0]  %s27, 256, %s29, [#allocation3], 128, 128, 8
    $region5: #{tpu_custom_call.1} parent=1 // pred_fallthru
      _
    // Predicated region
    $region6: #{tpu_custom_call.1} parent=1 // pred_check
      _
    $region7: #{tpu_custom_call.1} parent=1 // pred_check_branch
      %36 = sbr.rel (0) target = $region9
    $region8: #{tpu_custom_call.1} parent=1 // pred_region
      %38 = vsyncadd [#allocation6], 0
      %s39 = sshll.u32 %s1, 4
      %s40 = int_to_ptr.hbm [resolvable:$true] %s39
      %s41 = sshll.u32 [#allocation5], 4
      %s42 = int_to_ptr.vmem [resolvable:$true] %s41
      %47 = dma.hbm_to_vmem [thread:$0]  %s40, 2048, %s42, [#allocation6], 128, 128, 8
    $region9: #{tpu_custom_call.1} parent=1 // pred_fallthru
      _
    // Predicated region
    $region10: #{tpu_custom_call.1} parent=1 // pred_check
      _
    $region11: #{tpu_custom_call.1} parent=1 // pred_check_branch
      %49 = sbr.rel (0) target = $region13
    $region12: #{tpu_custom_call.1} parent=1 // pred_region
      _
    $region13: #{tpu_custom_call.1} parent=1 // pred_fallthru
      _
    // Predicated region
    $region14: #{tpu_custom_call.1} parent=1 // pred_check
      _
    $region15: #{tpu_custom_call.1} parent=1 // pred_check_branch
      %51 = sbr.rel (0) target = $region17
    $region16: #{tpu_custom_call.1} parent=1 // pred_region
      _
    $region17: #{tpu_custom_call.1} parent=1 // pred_fallthru
      _
    // Predicated region
    $region18: #{tpu_custom_call.1} parent=1 // pred_check
      _
    $region19: #{tpu_custom_call.1} parent=1 // pred_check_branch
      %53 = sbr.rel (0) target = $region21
    $region20: #{tpu_custom_call.1} parent=1 // pred_region
      _
    $region21: #{tpu_custom_call.1} parent=1 // pred_fallthru
      _
    // Predicated region
    $region22: #{tpu_custom_call.1} parent=1 // pred_check
      _
    $region23: #{tpu_custom_call.1} parent=1 // pred_check_branch
      %55 = sbr.rel (0) target = $region25
    $region24: #{tpu_custom_call.1} parent=1 // pred_region
      %57 = vsyncadd [#allocation6], 0
      %s58 = sshll.u32 %s5, 4
      %s59 = int_to_ptr.hbm [resolvable:$true] %s58
      %s60 = sshll.u32 [#allocation7], 4
      %s61 = int_to_ptr.vmem [resolvable:$true] %s60
      %66 = dma.hbm_to_vmem [thread:$0]  %s59, 2048, %s61, [#allocation6], 128, 128, 8
    $region25: #{tpu_custom_call.1} parent=1 // pred_fallthru
      _
    // Predicated region
    $region26: #{tpu_custom_call.1} parent=1 // pred_check
      _
    $region27: #{tpu_custom_call.1} parent=1 // pred_check_branch
      %68 = sbr.rel (0) target = $region29
    $region28: #{tpu_custom_call.1} parent=1 // pred_region
      _
    $region29: #{tpu_custom_call.1} parent=1 // pred_fallthru
      _
    // Predicated region
    $region30: #{tpu_custom_call.1} parent=1 // pred_check
      _
    $region31: #{tpu_custom_call.1} parent=1 // pred_check_branch
      %70 = sbr.rel (0) target = $region33
    $region32: #{tpu_custom_call.1} parent=1 // pred_region
      _
    $region33: #{tpu_custom_call.1} parent=1 // pred_fallthru
      _
    // Predicated region
    $region34: #{tpu_custom_call.1} parent=1 // pred_check
      _
    $region35: #{tpu_custom_call.1} parent=1 // pred_check_branch
      %72 = sbr.rel (0) target = $region37
    $region36: #{tpu_custom_call.1} parent=1 // pred_region
      _
    $region37: #{tpu_custom_call.1} parent=1 // pred_fallthru
      _
    // Predicated region
    $region38: #{tpu_custom_call.1} parent=1 // pred_check
      _
    $region39: #{tpu_custom_call.1} parent=1 // pred_check_branch
      %74 = sbr.rel (0) target = $region41
    $region40: #{tpu_custom_call.1} parent=1 // pred_region
      %76 = vsyncadd [#allocation9], 0
      %s77 = sshll.u32 %s9, 4
      %s78 = int_to_ptr.hbm [resolvable:$true] %s77
      %s79 = sshll.u32 [#allocation8], 4
      %s80 = int_to_ptr.vmem [resolvable:$true] %s79
      %85 = dma.hbm_to_vmem [thread:$0]  %s78, 2048, %s80, [#allocation9], 128, 128, 8
    $region41: #{tpu_custom_call.1} parent=1 // pred_fallthru
      _
    // Predicated region
    $region42: #{tpu_custom_call.1} parent=1 // pred_check
      _
    $region43: #{tpu_custom_call.1} parent=1 // pred_check_branch
      %87 = sbr.rel (0) target = $region45
    $region44: #{tpu_custom_call.1} parent=1 // pred_region
      _
    $region45: #{tpu_custom_call.1} parent=1 // pred_fallthru
      _
    // Predicated region
    $region46: #{tpu_custom_call.1} parent=1 // pred_check
      _
    $region47: #{tpu_custom_call.1} parent=1 // pred_check_branch
      %89 = sbr.rel (0) target = $region49
    $region48: #{tpu_custom_call.1} parent=1 // pred_region
      _
    $region49: #{tpu_custom_call.1} parent=1 // pred_fallthru
      _
    // Predicated region
    $region50: #{tpu_custom_call.1} parent=1 // pred_check
      _
    $region51: #{tpu_custom_call.1} parent=1 // pred_check_branch
      %91 = sbr.rel (0) target = $region53
    $region52: #{tpu_custom_call.1} parent=1 // pred_region
      _
    $region53: #{tpu_custom_call.1} parent=1 // pred_fallthru
      _
    // Predicated region
    $region54: #{tpu_custom_call.1} parent=1 // pred_check
      _
    $region55: #{tpu_custom_call.1} parent=1 // pred_check_branch
      %93 = sbr.rel (0) target = $region57
    $region56: #{tpu_custom_call.1} parent=1 // pred_region
      %95 = dma.done [#allocation3], 256
    $region57: #{tpu_custom_call.1} parent=1 // pred_fallthru
      _
    // Predicated region
    $region58: #{tpu_custom_call.1} parent=1 // pred_check
      _
    $region59: #{tpu_custom_call.1} parent=1 // pred_check_branch
      %97 = sbr.rel (0) target = $region61
    $region60: #{tpu_custom_call.1} parent=1 // pred_region
      %99 = dma.done [#allocation6], 2048
    $region61: #{tpu_custom_call.1} parent=1 // pred_fallthru
      _
    // Predicated region
    $region62: #{tpu_custom_call.1} parent=1 // pred_check
      _
    $region63: #{tpu_custom_call.1} parent=1 // pred_check_branch
      %101 = sbr.rel (0) target = $region65
    $region64: #{tpu_custom_call.1} parent=1 // pred_region
      %103 = dma.done [#allocation6], 2048
    $region65: #{tpu_custom_call.1} parent=1 // pred_fallthru
      _
    // Predicated region
    $region66: #{tpu_custom_call.1} parent=1 // pred_check
      _
    $region67: #{tpu_custom_call.1} parent=1 // pred_check_branch
      %105 = sbr.rel (0) target = $region69
    $region68: #{tpu_custom_call.1} parent=1 // pred_region
      %107 = dma.done [#allocation9], 2048
    $region69: #{tpu_custom_call.1} parent=1 // pred_fallthru
      _
    %v108 = vld [vmem:[#allocation2] sm:$0xff]
    %v109 = vld [vmem:[#allocation2 + $0x8] sm:$0xff]
    %v110 = vld [vmem:[#allocation5] sm:$0xff]
    %v111 = vld [vmem:[#allocation5 + $0x8] sm:$0xff]
    %v112 = vld [vmem:[#allocation5 + $0x10] sm:$0xff]
    %v113 = vld [vmem:[#allocation5 + $0x18] sm:$0xff]
    %v114 = vld [vmem:[#allocation5 + $0x20] sm:$0xff]
    %v115 = vld [vmem:[#allocation5 + $0x28] sm:$0xff]
    %v116 = vld [vmem:[#allocation5 + $0x30] sm:$0xff]
    %v117 = vld [vmem:[#allocation5 + $0x38] sm:$0xff]
    %v118 = vld [vmem:[#allocation5 + $0x40] sm:$0xff]
    %v119 = vld [vmem:[#allocation5 + $0x48] sm:$0xff]
    %v120 = vld [vmem:[#allocation5 + $0x50] sm:$0xff]
    %v121 = vld [vmem:[#allocation5 + $0x58] sm:$0xff]
    %v122 = vld [vmem:[#allocation5 + $0x60] sm:$0xff]
    %v123 = vld [vmem:[#allocation5 + $0x68] sm:$0xff]
    %v124 = vld [vmem:[#allocation5 + $0x70] sm:$0xff]
    %v125 = vld [vmem:[#allocation5 + $0x78] sm:$0xff]
    %v126 = vld [vmem:[%s2] sm:$0x1]
    %v127 = vld [vmem:[%s3] sm:$0x1]
    %v128 = vld [vmem:[%s4] sm:$0x1]
    %v130 = vperm.slane %v126, 0
    %132 = vmatpush.msra.mxu0 %v125
    %133 = vmatpush.msra.mxu0 %v124
    %134 = vmatpush.msra.mxu0 %v123
    %135 = vmatpush.msra.mxu0 %v122
    %136 = vmatpush.msra.mxu0 %v121
    %137 = vmatpush.msra.mxu0 %v120
    %138 = vmatpush.msra.mxu0 %v119
    %139 = vmatpush.msra.mxu0 %v118
    %140 = vmatpush.msra.mxu0 %v117
    %141 = vmatpush.msra.mxu0 %v116
    %142 = vmatpush.msra.mxu0 %v115
    %143 = vmatpush.msra.mxu0 %v114
    %144 = vmatpush.msra.mxu0 %v113
    %145 = vmatpush.msra.mxu0 %v112
    %146 = vmatpush.msra.mxu0 %v111
    %147 = vmatpush.msra.mxu0 %v110
    %148 = vmatmul.f32.gmra.mxu0 %v108
    %v149 = vpop.f32.mrf.mxu0
    %v150 = vadd.f32 %v130, %v149
    %151 = vmatmul.f32.gmra.mxu0 %v109
    %v152 = vpop.f32.mrf.mxu0
    %v153 = vadd.f32 %v130, %v152
    %154 = vdwg.mxu0
    %v155 = vmax.f32 %v150, 0.0
    %v156 = vmax.f32 %v153, 0.0
    %v157 = vadd.f32 %v155, %v156
    %v158 = vrot.slane %v157, 4
    %v159 = vadd.f32 %v157, %v158
    %v160 = vrot.slane %v159, 2
    %v161 = vadd.f32 %v159, %v160
    %v162 = vrot.slane %v161, 1
    %v163 = vadd.f32 %v161, %v162
    %v164 = vmul.f32 %v163, 0.0625
    %v165 = vsub.f32 %v155, %v164
    %v166 = vsub.f32 %v156, %v164
    %v167 = vmul.f32 %v165, %v165
    %v168 = vmul.f32 %v166, %v166
    %v169 = vadd.f32 %v167, %v168
    %v170 = vrot.slane %v169, 4
    %v171 = vadd.f32 %v169, %v170
    %v172 = vrot.slane %v171, 2
    %v173 = vadd.f32 %v171, %v172
    %v174 = vrot.slane %v173, 1
    %v175 = vadd.f32 %v173, %v174
    %v176 = vmul.f32 %v175, 0.0625
    %v177 = vadd.f32 %v176, 1e-05
    %v178 = vrsqrt.pop %v177
    %v179 = vmul.f32 %v178, %v177
    %v180 = vmul.f32 %v179, %v178
    %v181 = vmul.f32 0.5, %v180
    %v182 = vsub.f32 1.5, %v181
    %v183 = vmul.f32 %v178, %v182
    %vm184 = vweird.f32 %v177
    %vm185 = vweird.f32 %v178
    %vm186 = vmor %vm184, %vm185
    %v187 = vsel %vm186, %v178, %v183
    %v188 = vmul.f32 %v165, %v187
    %v189 = vmul.f32 %v166, %v187
    %v191 = vperm.slane %v127, 0
    %v193 = vmul.f32 %v188, %v191
    %v194 = vmul.f32 %v189, %v191
    %v196 = vperm.slane %v128, 0
    %v198 = vadd.f32 %v193, %v196
    %v199 = vadd.f32 %v194, %v196
    %v200 = vld [vmem:[#allocation7] sm:$0xff]
    %v201 = vld [vmem:[#allocation7 + $0x8] sm:$0xff]
    %v202 = vld [vmem:[#allocation7 + $0x10] sm:$0xff]
    %v203 = vld [vmem:[#allocation7 + $0x18] sm:$0xff]
    %v204 = vld [vmem:[#allocation7 + $0x20] sm:$0xff]
    %v205 = vld [vmem:[#allocation7 + $0x28] sm:$0xff]
    %v206 = vld [vmem:[#allocation7 + $0x30] sm:$0xff]
    %v207 = vld [vmem:[#allocation7 + $0x38] sm:$0xff]
    %v208 = vld [vmem:[#allocation7 + $0x40] sm:$0xff]
    %v209 = vld [vmem:[#allocation7 + $0x48] sm:$0xff]
    %v210 = vld [vmem:[#allocation7 + $0x50] sm:$0xff]
    %v211 = vld [vmem:[#allocation7 + $0x58] sm:$0xff]
    %v212 = vld [vmem:[#allocation7 + $0x60] sm:$0xff]
    %v213 = vld [vmem:[#allocation7 + $0x68] sm:$0xff]
    %v214 = vld [vmem:[#allocation7 + $0x70] sm:$0xff]
    %v215 = vld [vmem:[#allocation7 + $0x78] sm:$0xff]
    %v216 = vld [vmem:[%s6] sm:$0x1]
    %v217 = vld [vmem:[%s7] sm:$0x1]
    %v218 = vld [vmem:[%s8] sm:$0x1]
    %v220 = vperm.slane %v216, 0
    %222 = vmatpush.msra.mxu0 %v215
    %223 = vmatpush.msra.mxu0 %v214
    %224 = vmatpush.msra.mxu0 %v213
    %225 = vmatpush.msra.mxu0 %v212
    %226 = vmatpush.msra.mxu0 %v211
    %227 = vmatpush.msra.mxu0 %v210
    %228 = vmatpush.msra.mxu0 %v209
    %229 = vmatpush.msra.mxu0 %v208
    %230 = vmatpush.msra.mxu0 %v207
    %231 = vmatpush.msra.mxu0 %v206
    %232 = vmatpush.msra.mxu0 %v205
    %233 = vmatpush.msra.mxu0 %v204
    %234 = vmatpush.msra.mxu0 %v203
    %235 = vmatpush.msra.mxu0 %v202
    %236 = vmatpush.msra.mxu0 %v201
    %237 = vmatpush.msra.mxu0 %v200
    %238 = vmatmul.f32.gmra.mxu0 %v198
    %v239 = vpop.f32.mrf.mxu0
    %v240 = vadd.f32 %v220, %v239
    %241 = vmatmul.f32.gmra.mxu0 %v199
    %v242 = vpop.f32.mrf.mxu0
    %v243 = vadd.f32 %v220, %v242
    %244 = vdwg.mxu0
    %v245 = vmax.f32 %v240, 0.0
    %v246 = vmax.f32 %v243, 0.0
    %v247 = vadd.f32 %v245, %v246
    %v248 = vrot.slane %v247, 4
    %v249 = vadd.f32 %v247, %v248
    %v250 = vrot.slane %v249, 2
    %v251 = vadd.f32 %v249, %v250
    %v252 = vrot.slane %v251, 1
    %v253 = vadd.f32 %v251, %v252
    %v254 = vmul.f32 %v253, 0.0625
    %v255 = vsub.f32 %v245, %v254
    %v256 = vsub.f32 %v246, %v254
    %v257 = vmul.f32 %v255, %v255
    %v258 = vmul.f32 %v256, %v256
    %v259 = vadd.f32 %v257, %v258
    %v260 = vrot.slane %v259, 4
    %v261 = vadd.f32 %v259, %v260
    %v262 = vrot.slane %v261, 2
    %v263 = vadd.f32 %v261, %v262
    %v264 = vrot.slane %v263, 1
    %v265 = vadd.f32 %v263, %v264
    %v266 = vmul.f32 %v265, 0.0625
    %v267 = vadd.f32 %v266, 1e-05
    %v268 = vrsqrt.pop %v267
    %v269 = vmul.f32 %v268, %v267
    %v270 = vmul.f32 %v269, %v268
    %v271 = vmul.f32 0.5, %v270
    %v272 = vsub.f32 1.5, %v271
    %v273 = vmul.f32 %v268, %v272
    %vm274 = vweird.f32 %v267
    %vm275 = vweird.f32 %v268
    %vm276 = vmor %vm274, %vm275
    %v277 = vsel %vm276, %v268, %v273
    %v278 = vmul.f32 %v255, %v277
    %v279 = vmul.f32 %v256, %v277
    %v281 = vperm.slane %v217, 0
    %v283 = vmul.f32 %v278, %v281
    %v284 = vmul.f32 %v279, %v281
    %v286 = vperm.slane %v218, 0
    %v288 = vadd.f32 %v283, %v286
    %v289 = vadd.f32 %v284, %v286
    %v290 = vld [vmem:[#allocation8] sm:$0xff]
    %v291 = vld [vmem:[#allocation8 + $0x8] sm:$0xff]
    %v292 = vld [vmem:[#allocation8 + $0x10] sm:$0xff]
    %v293 = vld [vmem:[#allocation8 + $0x18] sm:$0xff]
    %v294 = vld [vmem:[#allocation8 + $0x20] sm:$0xff]
    %v295 = vld [vmem:[#allocation8 + $0x28] sm:$0xff]
    %v296 = vld [vmem:[#allocation8 + $0x30] sm:$0xff]
    %v297 = vld [vmem:[#allocation8 + $0x38] sm:$0xff]
    %v298 = vld [vmem:[#allocation8 + $0x40] sm:$0xff]
    %v299 = vld [vmem:[#allocation8 + $0x48] sm:$0xff]
    %v300 = vld [vmem:[#allocation8 + $0x50] sm:$0xff]
    %v301 = vld [vmem:[#allocation8 + $0x58] sm:$0xff]
    %v302 = vld [vmem:[#allocation8 + $0x60] sm:$0xff]
    %v303 = vld [vmem:[#allocation8 + $0x68] sm:$0xff]
    %v304 = vld [vmem:[#allocation8 + $0x70] sm:$0xff]
    %v305 = vld [vmem:[#allocation8 + $0x78] sm:$0xff]
    %v306 = vld [vmem:[%s10] sm:$0x1]
    %v307 = vld [vmem:[%s11] sm:$0x1]
    %v308 = vld [vmem:[%s12] sm:$0x1]
    %v310 = vperm.slane %v306, 0
    %312 = vmatpush.msra.mxu0 %v305
    %313 = vmatpush.msra.mxu0 %v304
    %314 = vmatpush.msra.mxu0 %v303
    %315 = vmatpush.msra.mxu0 %v302
    %316 = vmatpush.msra.mxu0 %v301
    %317 = vmatpush.msra.mxu0 %v300
    %318 = vmatpush.msra.mxu0 %v299
    %319 = vmatpush.msra.mxu0 %v298
    %320 = vmatpush.msra.mxu0 %v297
    %321 = vmatpush.msra.mxu0 %v296
    %322 = vmatpush.msra.mxu0 %v295
    %323 = vmatpush.msra.mxu0 %v294
    %324 = vmatpush.msra.mxu0 %v293
    %325 = vmatpush.msra.mxu0 %v292
    %326 = vmatpush.msra.mxu0 %v291
    %327 = vmatpush.msra.mxu0 %v290
    %328 = vmatmul.f32.gmra.mxu0 %v288
    %v329 = vpop.f32.mrf.mxu0
    %v330 = vadd.f32 %v310, %v329
    %331 = vmatmul.f32.gmra.mxu0 %v289
    %v332 = vpop.f32.mrf.mxu0
    %v333 = vadd.f32 %v310, %v332
    %334 = vdwg.mxu0
    %v335 = vmax.f32 %v330, 0.0
    %v336 = vmax.f32 %v333, 0.0
    %v337 = vadd.f32 %v335, %v336
    %v338 = vrot.slane %v337, 4
    %v339 = vadd.f32 %v337, %v338
    %v340 = vrot.slane %v339, 2
    %v341 = vadd.f32 %v339, %v340
    %v342 = vrot.slane %v341, 1
    %v343 = vadd.f32 %v341, %v342
    %v344 = vmul.f32 %v343, 0.0625
    %v345 = vsub.f32 %v335, %v344
    %v346 = vsub.f32 %v336, %v344
    %v347 = vmul.f32 %v345, %v345
    %v348 = vmul.f32 %v346, %v346
    %v349 = vadd.f32 %v347, %v348
    %v350 = vrot.slane %v349, 4
    %v351 = vadd.f32 %v349, %v350
    %v352 = vrot.slane %v351, 2
    %v353 = vadd.f32 %v351, %v352
    %v354 = vrot.slane %v353, 1
    %v355 = vadd.f32 %v353, %v354
    %v356 = vmul.f32 %v355, 0.0625
    %v357 = vadd.f32 %v356, 1e-05
    %v358 = vrsqrt.pop %v357
    %v359 = vmul.f32 %v358, %v357
    %v360 = vmul.f32 %v359, %v358
    %v361 = vmul.f32 0.5, %v360
    %v362 = vsub.f32 1.5, %v361
    %v363 = vmul.f32 %v358, %v362
    %vm364 = vweird.f32 %v357
    %vm365 = vweird.f32 %v358
    %vm366 = vmor %vm364, %vm365
    %v367 = vsel %vm366, %v358, %v363
    %v368 = vmul.f32 %v345, %v367
    %v369 = vmul.f32 %v346, %v367
    %v371 = vperm.slane %v307, 0
    %v373 = vmul.f32 %v368, %v371
    %v374 = vmul.f32 %v369, %v371
    %v376 = vperm.slane %v308, 0
    %v378 = vadd.f32 %v373, %v376
    %v379 = vadd.f32 %v374, %v376
    %380 = vst [vmem:[#allocation10] sm:$0xff] %v378
    %381 = vst [vmem:[#allocation10 + $0x8] sm:$0xff] %v379
    // Predicated region
    $region70: #{tpu_custom_call.1} parent=1 // pred_check
      _
    $region71: #{tpu_custom_call.1} parent=1 // pred_check_branch
      %383 = sbr.rel (0) target = $region73
    $region72: #{tpu_custom_call.1} parent=1 // pred_region
      %385 = vsyncadd [#allocation4], 0
      %s386 = sshll.u32 [#allocation10], 4
      %s387 = int_to_ptr.vmem [resolvable:$true] %s386
      %s388 = sshll.u32 %s13, 4
      %s389 = int_to_ptr.hbm [resolvable:$true] %s388
      %394 = dma.vmem_to_hbm [thread:$0]  %s387, 256, %s389, [#allocation4], 128, 128, 8
    $region73: #{tpu_custom_call.1} parent=1 // pred_fallthru
      _
    // Predicated region
    $region74: #{tpu_custom_call.1} parent=1 // pred_check
      _
    $region75: #{tpu_custom_call.1} parent=1 // pred_check_branch
      %396 = sbr.rel (0) target = $region77
    $region76: #{tpu_custom_call.1} parent=1 // pred_region
      %398 = dma.done [#allocation4], 256
    $region77: #{tpu_custom_call.1} parent=1 // pred_fallthru
      _
    %399 = vsyncpa [#allocation3], 1
    %400 = vsyncpa [#allocation6], 1
    %401 = vsyncpa [#allocation9], 1
    %402 = vsyncpa [#allocation4], 1

</llo_original>
